<compile_context>
chip_gen: v5e
topology: v5e:2x2
jax: 0.10.0
libtpu: 0.0.40
codegen_flags: <defaults>
</compile_context>

<pallas_src>
import functools

import jax
import jax.numpy as jnp
from jax import lax
from jax.experimental import pallas as pl
from jax.experimental.pallas import tpu as pltpu


def _round_up(x, m):
    return ((x + m - 1) // m) * m


def dnn_kernel(x_ref, w1_ref, b1_ref, w2_ref, b2_ref, o_ref, *,
               n_chunks, chunk_rows):
    """Fused fc1 -> ReLU -> fc2 -> log_softmax for one batch tile.

    The tile is split into `n_chunks` row chunks so elementwise/EUP epilogue
    work of chunk c hides under the MXU matmuls of chunk c+1. Padded output
    lanes already carry b2 = -1e30 (padded w2 columns are zero), so they drop
    out of the softmax sum with no extra masking ops here.
    """
    w1 = w1_ref[...]
    b1 = b1_ref[...]
    w2 = w2_ref[...]
    b2 = b2_ref[...]

    def body(c, carry):
        r0 = pl.multiple_of(c * chunk_rows, 16)
        xb = x_ref[pl.ds(r0, chunk_rows), :].astype(jnp.bfloat16)
        # fc1: bf16 MXU, f32 accumulate; bias + ReLU in f32 on the VPU.
        h = jnp.dot(xb, w1, preferred_element_type=jnp.float32)
        h = jnp.maximum(h + b1, 0.0)
        # fc2: bf16 MXU, f32 accumulate; padded lanes become ~-1e30 via b2.
        logits = jnp.dot(h.astype(jnp.bfloat16), w2,
                         preferred_element_type=jnp.float32)
        logits = logits + b2
        # Numerically stable log_softmax over features (PyTorch dim=1).
        m = jnp.max(logits, axis=1, keepdims=True)
        shifted = logits - m
        lse = jnp.log(jnp.sum(jnp.exp(shifted), axis=1, keepdims=True))
        o_ref[pl.ds(r0, chunk_rows), :] = (shifted - lse).astype(o_ref.dtype)
        return carry

    lax.fori_loop(0, n_chunks, body, 0, unroll=True)


def dnn_forward(x, w1, b1, w2, b2, *, max_tile_b=512, vmem_budget=40 << 20):
    """x: (B, D_in) f32; w1: (D_in, H); b1: (H,); w2: (H, D_out); b2: (D_out,)."""
    B, D_in = x.shape
    H = w1.shape[1]
    D_out = w2.shape[1]

    # Lane-pad feature dims to 128.
    d_in_p = _round_up(D_in, 128)
    h_p = _round_up(H, 128)
    d_out_p = _round_up(D_out, 128)

    # If the feature dim needs padding we materialize x once as padded bf16
    # (8 B/elt HBM traffic); otherwise we stream the original f32 array
    # directly (4 B/elt) and cast per chunk inside the kernel.
    x_stream_bytes = 2 if d_in_p != D_in else 4

    def n_chunks_for(t):
        return min(4, t // 128) if t >= 256 else 1

    def vmem_est(t):
        nc = n_chunks_for(t)
        chunk = max(t // nc, 1)
        weights = (d_in_p * h_p + h_p * d_out_p) * 2        # bf16, Buffered(1)
        biases = (h_p + d_out_p) * 4                        # f32, Buffered(1)
        streams = 2 * t * d_in_p * x_stream_bytes + 2 * t * d_out_p * 4
        live = chunk * h_p * 6 + 3 * chunk * d_out_p * 4    # f32 h + bf16 copy + logits
        return weights + biases + streams + live

    # Shrink the batch-tile cap until everything fits a conservative VMEM
    # budget (v7x has only 64 MiB/TC; v5e's scoped default is 16 MiB).
    tile_cap = max(16, _round_up(max_tile_b, 16))
    while tile_cap > 64 and vmem_est(tile_cap) > vmem_budget:
        tile_cap //= 2

    # Balanced batch tiles, >=2 so both v7x TensorCores get work; 16-row
    # aligned for bf16 sublane packing; aligned to the chunk count so the
    # in-kernel sub-chunks divide evenly.
    n_tiles = max(2, pl.cdiv(B, tile_cap))
    tile_b = _round_up(pl.cdiv(B, n_tiles), 16)
    n_chunks = n_chunks_for(tile_b)
    tile_b = _round_up(tile_b, 16 * n_chunks)
    chunk_rows = tile_b // n_chunks
    b_p = n_tiles * tile_b

    # Inputs. Zero padding is exact through matmul/bias/ReLU; padded output
    # lanes are killed by b2 = -1e30; padded batch rows are sliced off below.
    needs_x_copy = (d_in_p != D_in) or (b_p != B)
    if needs_x_copy:
        x_in = jnp.pad(x, ((0, b_p - B), (0, d_in_p - D_in))).astype(jnp.bfloat16)
    else:
        x_in = x  # f32 passthrough, cast per-chunk in-kernel (no extra HBM pass)

    w1_p = jnp.pad(w1, ((0, d_in_p - D_in), (0, h_p - H))).astype(jnp.bfloat16)
    b1_p = jnp.pad(b1, (0, h_p - H)).reshape(1, h_p).astype(jnp.float32)
    w2_p = jnp.pad(w2, ((0, h_p - H), (0, d_out_p - D_out))).astype(jnp.bfloat16)
    # Pad b2 with -1e30: padded w2 columns are zero so padded logits become
    # exactly -1e30 and vanish from the softmax sum (no in-kernel masking).
    b2_p = jnp.pad(b2.astype(jnp.float32), (0, d_out_p - D_out),
                   constant_values=-1e30).reshape(1, d_out_p)

    grid = (b_p // tile_b,)
    kernel = functools.partial(dnn_kernel, n_chunks=n_chunks,
                               chunk_rows=chunk_rows)

    est = vmem_est(tile_b)
    vmem_limit = int(min(56 << 20, max(32 << 20, est + est // 4 + (2 << 20))))

    cost = pl.CostEstimate(
        flops=2 * b_p * (d_in_p * h_p + h_p * d_out_p),
        transcendentals=b_p * (d_out_p + 1),
        bytes_accessed=(b_p * d_in_p * x_stream_bytes
                        + (d_in_p * h_p + h_p * d_out_p) * 2
                        + (h_p + d_out_p) * 4
                        + b_p * d_out_p * 4),
    )

    out_p = pl.pallas_call(
        kernel,
        out_shape=jax.ShapeDtypeStruct((b_p, d_out_p), jnp.float32),
        grid_spec=pltpu.PrefetchScalarGridSpec(
            num_scalar_prefetch=0,
            grid=grid,
            in_specs=[
                # Streamed & double-buffered per batch tile.
                pl.BlockSpec((tile_b, d_in_p), lambda i: (i, 0)),
                # VMEM-resident weights & biases: constant index_map, single
                # pipeline buffer (halves their VMEM footprint).
                pl.BlockSpec((d_in_p, h_p), lambda i: (0, 0),
                             pipeline_mode=pl.Buffered(1)),
                pl.BlockSpec((1, h_p), lambda i: (0, 0),
                             pipeline_mode=pl.Buffered(1)),
                pl.BlockSpec((h_p, d_out_p), lambda i: (0, 0),
                             pipeline_mode=pl.Buffered(1)),
                pl.BlockSpec((1, d_out_p), lambda i: (0, 0),
                             pipeline_mode=pl.Buffered(1)),
            ],
            out_specs=pl.BlockSpec((tile_b, d_out_p), lambda i: (i, 0)),
        ),
        compiler_params=pltpu.CompilerParams(
            # Batch tiles are independent -> megacore-shardable on v7x.
            dimension_semantics=("parallel",),
            vmem_limit_bytes=vmem_limit,
        ),
        cost_estimate=cost,
    )(x_in, w1_p, b1_p, w2_p, b2_p)

    return out_p[:B, :D_out]


def init_params(key, input_dim, hidden_dim, output_dim):
    """Deterministic init mimicking nn.Linear default (uniform +-1/sqrt(fan_in)).
    Weights stored already transposed to (in, out)."""
    k1, k2, k3, k4 = jax.random.split(key, 4)
    bound1 = 1.0 / jnp.sqrt(input_dim)
    bound2 = 1.0 / jnp.sqrt(hidden_dim)
    w1 = jax.random.uniform(k1, (input_dim, hidden_dim), jnp.float32, -bound1, bound1)
    b1 = jax.random.uniform(k2, (hidden_dim,), jnp.float32, -bound1, bound1)
    w2 = jax.random.uniform(k3, (hidden_dim, output_dim), jnp.float32, -bound2, bound2)
    b2 = jax.random.uniform(k4, (output_dim,), jnp.float32, -bound2, bound2)
    return w1, b1, w2, b2


def dnn_reference(x, w1, b1, w2, b2):
    h = jnp.maximum(x @ w1 + b1, 0.0)
    logits = h @ w2 + b2
    return jax.nn.log_softmax(logits, axis=1)


if __name__ == "__main__":
    key = jax.random.PRNGKey(0)
    batch, input_dim, hidden_dim, output_dim = 8, 16, 32, 8
    kx, kp = jax.random.split(key)
    x = jax.random.normal(kx, (batch, input_dim), jnp.float32)
    w1, b1, w2, b2 = init_params(kp, input_dim, hidden_dim, output_dim)

    out = dnn_forward(x, w1, b1, w2, b2)
    out = jax.block_until_ready(out)

    ref = dnn_reference(x, w1, b1, w2, b2)
    assert out.shape == (batch, output_dim)
    assert not bool(jnp.any(jnp.isnan(out)))
    # Loose tolerance: kernel uses bf16 MXU inputs with f32 accumulation,
    # reference is full f32.
    assert jnp.allclose(out, ref, atol=2e-2, rtol=2e-2), (
        float(jnp.max(jnp.abs(out - ref))))
    print("KERNEL_OK")
</pallas_src>

<mosaic_0001>
module attributes {stable_mosaic.version = 11 : i64} {
  func.func @dnn_kernel(%arg0: i32, %arg1: memref<16x128xbf16, #tpu.memory_space<vmem>>, %arg2: memref<128x128xbf16, #tpu.memory_space<vmem>>, %arg3: memref<1x128xf32, #tpu.memory_space<vmem>>, %arg4: memref<128x128xbf16, #tpu.memory_space<vmem>>, %arg5: memref<1x128xf32, #tpu.memory_space<vmem>>, %arg6: memref<16x128xf32, #tpu.memory_space<vmem>>) attributes {dimension_semantics = [#tpu.dimension_semantics<parallel>], iteration_bounds = array<i64: 2>, scalar_prefetch = 0 : i64, scratch_operands = 0 : i64, tpu.core_type = #tpu.core_type<tc>, window_params = [{transform_indices = @transform_0, window_bounds = array<i64: 16, 128>}, {pipeline_mode = #tpu.pipeline_mode<synchronous>, transform_indices = @transform_1, window_bounds = array<i64: 128, 128>}, {pipeline_mode = #tpu.pipeline_mode<synchronous>, transform_indices = @transform_2, window_bounds = array<i64: 1, 128>}, {pipeline_mode = #tpu.pipeline_mode<synchronous>, transform_indices = @transform_3, window_bounds = array<i64: 128, 128>}, {pipeline_mode = #tpu.pipeline_mode<synchronous>, transform_indices = @transform_4, window_bounds = array<i64: 1, 128>}, {transform_indices = @transform_5, window_bounds = array<i64: 16, 128>}]} {
    %c0 = arith.constant 0 : index
    %c0_0 = arith.constant 0 : index
    %0 = vector.load %arg2[%c0, %c0_0] : memref<128x128xbf16, #tpu.memory_space<vmem>>, vector<128x128xbf16>
    %c0_1 = arith.constant 0 : index
    %c0_2 = arith.constant 0 : index
    %1 = vector.load %arg3[%c0_1, %c0_2] : memref<1x128xf32, #tpu.memory_space<vmem>>, vector<1x128xf32>
    %c0_3 = arith.constant 0 : index
    %c0_4 = arith.constant 0 : index
    %2 = vector.load %arg4[%c0_3, %c0_4] : memref<128x128xbf16, #tpu.memory_space<vmem>>, vector<128x128xbf16>
    %c0_5 = arith.constant 0 : index
    %c0_6 = arith.constant 0 : index
    %3 = vector.load %arg5[%c0_5, %c0_6] : memref<1x128xf32, #tpu.memory_space<vmem>>, vector<1x128xf32>
    %c0_i32 = arith.constant 0 : i32
    %c16_i32 = arith.constant 16 : i32
    %4 = arith.muli %c0_i32, %c16_i32 : i32
    %5 = tpu.assume_multiple %4, 16 : i32
    %6 = arith.index_cast %5 : i32 to index
    %c0_7 = arith.constant 0 : index
    %7 = vector.load %arg1[%6, %c0_7] : memref<16x128xbf16, #tpu.memory_space<vmem>>, vector<16x128xbf16>
    %cst = arith.constant dense<0.000000e+00> : vector<16x128xf32>
    %8 = tpu.matmul %7, %0, %cst {dimension_numbers = #tpu.dot_dimension_numbers<[1], [0], [0], [1], [0, 0, 1, 1], [], []>} : vector<16x128xbf16>, vector<128x128xbf16>, vector<16x128xf32> -> vector<16x128xf32>
    %9 = vector.broadcast %1 : vector<1x128xf32> to vector<16x128xf32>
    %10 = arith.addf %8, %9 : vector<16x128xf32>
    %cst_8 = arith.constant 0.000000e+00 : f32
    %11 = vector.broadcast %cst_8 : f32 to vector<16x128xf32>
    %12 = arith.maximumf %10, %11 : vector<16x128xf32>
    %13 = arith.truncf %12 : vector<16x128xf32> to vector<16x128xbf16>
    %cst_9 = arith.constant dense<0.000000e+00> : vector<16x128xf32>
    %14 = tpu.matmul %13, %2, %cst_9 {dimension_numbers = #tpu.dot_dimension_numbers<[1], [0], [0], [1], [0, 0, 1, 1], [], []>} : vector<16x128xbf16>, vector<128x128xbf16>, vector<16x128xf32> -> vector<16x128xf32>
    %15 = vector.broadcast %3 : vector<1x128xf32> to vector<16x128xf32>
    %16 = arith.addf %14, %15 : vector<16x128xf32>
    %cst_10 = arith.constant dense<0xFF800000> : vector<16xf32>
    %17 = vector.multi_reduction <maximumf>, %16, %cst_10 [1] : vector<16x128xf32> to vector<16xf32>
    %18 = vector.shape_cast %17 : vector<16xf32> to vector<16x1xf32>
    %19 = vector.broadcast %18 : vector<16x1xf32> to vector<16x128xf32>
    %20 = arith.subf %16, %19 : vector<16x128xf32>
    %21 = math.exp %20 : vector<16x128xf32>
    %cst_11 = arith.constant dense<0.000000e+00> : vector<16xf32>
    %22 = vector.multi_reduction <add>, %21, %cst_11 [1] : vector<16x128xf32> to vector<16xf32>
    %23 = vector.shape_cast %22 : vector<16xf32> to vector<16x1xf32>
    %24 = math.log %23 : vector<16x1xf32>
    %25 = vector.broadcast %24 : vector<16x1xf32> to vector<16x128xf32>
    %26 = arith.subf %20, %25 : vector<16x128xf32>
    %27 = arith.index_cast %5 : i32 to index
    %c0_12 = arith.constant 0 : index
    %28 = vector.load %arg6[%27, %c0_12] : memref<16x128xf32, #tpu.memory_space<vmem>>, vector<16x128xf32>
    tpu.vector_store %arg6[%27, %c0_12], %26 {strides = array<i32>} : memref<16x128xf32, #tpu.memory_space<vmem>>, vector<16x128xf32>,
    %c1_i32 = arith.constant 1 : i32
    return
  }
  func.func @transform_0(%arg0: i32) -> (i32, i32) {
    %c0_i32 = arith.constant 0 : i32
    %c0_i32_0 = arith.constant 0 : i32
    return %arg0, %c0_i32 : i32, i32
  }
  func.func @transform_1(%arg0: i32) -> (i32, i32) {
    %c0_i32 = arith.constant 0 : i32
    %c0_i32_0 = arith.constant 0 : i32
    %c0_i32_1 = arith.constant 0 : i32
    return %c0_i32, %c0_i32_0 : i32, i32
  }
  func.func @transform_2(%arg0: i32) -> (i32, i32) {
    %c0_i32 = arith.constant 0 : i32
    %c0_i32_0 = arith.constant 0 : i32
    %c0_i32_1 = arith.constant 0 : i32
    return %c0_i32, %c0_i32_0 : i32, i32
  }
  func.func @transform_3(%arg0: i32) -> (i32, i32) {
    %c0_i32 = arith.constant 0 : i32
    %c0_i32_0 = arith.constant 0 : i32
    %c0_i32_1 = arith.constant 0 : i32
    return %c0_i32, %c0_i32_0 : i32, i32
  }
  func.func @transform_4(%arg0: i32) -> (i32, i32) {
    %c0_i32 = arith.constant 0 : i32
    %c0_i32_0 = arith.constant 0 : i32
    %c0_i32_1 = arith.constant 0 : i32
    return %c0_i32, %c0_i32_0 : i32, i32
  }
  func.func @transform_5(%arg0: i32) -> (i32, i32) {
    %c0_i32 = arith.constant 0 : i32
    %c0_i32_0 = arith.constant 0 : i32
    return %arg0, %c0_i32 : i32, i32
  }
}

</mosaic_0001>

<llo_original>
// kernel: tpu_custom_call.1
$region0: #{tpu_custom_call.1}
  #allocation0 [shape = 'u32[]', space=smem, size = 0x4, offset = 0x4, fixed_abs, tag = 'smem constant byte address 0x4 - core index']
  #allocation1 [shape = 'u32[72,128]{1,0:T(1,128)}', space=vmem, size = 0x9000, scoped, tag = 'internal scratch']
  %s0 = inlined_call_operand.hbm [shape: bf16[32,128], index: 0, kind: input, shape index: {}]
  %s1 = inlined_call_operand.hbm [shape: bf16[128,128], index: 1, kind: input, shape index: {}]
  %s2 = inlined_call_operand.vmem [shape: f32[1,128], index: 2, kind: input, shape index: {}]
  %s3 = inlined_call_operand.hbm [shape: bf16[128,128], index: 3, kind: input, shape index: {}]
  %s4 = inlined_call_operand.vmem [shape: f32[1,128], index: 4, kind: input, shape index: {}]
  %s5 = inlined_call_operand.hbm [shape: f32[32,128], index: 5, kind: output, shape index: {}]
  %s6 = sld [smem:[#allocation0]]
  $region65: #{tpu_custom_call.1} parent=0
    _
  %s8 = ssub.s32 1, %s6
  %s9 = scalar_select 0, %s8, %s6
  $region1: #{tpu_custom_call.1} parent=0
    #allocation2 [shape = 'u8[8192]{0}', space=vmem, size = 0x2000, scoped, tag = 'input window, operand 0']
    #allocation3 [shape = 's32[2]{0}', space=sflag, size = 0x8, scoped, tag = 'scoped memory for tpu_custom_call.1']
    #allocation4 [shape = 's32[2]{0}', space=sflag, size = 0x8, scoped, tag = 'scoped memory for tpu_custom_call.1']
    #allocation5 [shape = 'u8[32768]{0}', space=vmem, size = 0x8000, scoped, tag = 'input window, operand 1, single buffered']
    #allocation6 [shape = 's32[1]{0}', space=sflag, size = 0x4, scoped, tag = 'scoped memory for tpu_custom_call.1']
    #allocation7 [shape = 'u8[32768]{0}', space=vmem, size = 0x8000, scoped, tag = 'input window, operand 3, single buffered']
    #allocation8 [shape = 'u8[16384]{0}', space=vmem, size = 0x4000, scoped, tag = 'output window, operand 0']
    %10 = vsyncpa [#allocation3], 0
    %s11 = scalar_lea.sflag [#allocation3], 1
    %12 = vsyncpa %s11, 0
    %13 = vsyncpa [#allocation6], 0
    %14 = vsyncpa [#allocation4], 0
    %s15 = scalar_lea.sflag [#allocation4], 1
    %16 = vsyncpa %s15, 0
    loop: start=0, step=1, limit=4
    $region2: #{tpu_custom_call.1} parent=1 // loop_pre_header
      _
    $region3: #{tpu_custom_call.1} parent=1 // loop_header
      %s18 = sphi 0, %s22
      %p19 = scmp.ge.s32.totalorder %s18, 4
      %s28 = sphi 0, %s30
      %s31 = sphi 0, %s28
      %s32 = sphi 0, %s31
      %s48 = sphi 0, %s32
      %s52 = sphi 0, %s52
      %s54 = sphi 0, %s52
      %s55 = sphi 0, %s54
      %s69 = sphi 0, %s55
      %s73 = sphi 0, %s73
      %s75 = sphi 0, %s73
      %s76 = sphi 0, %s75
      %s90 = sphi 0, %s76
      %s94 = sphi 0, %s94
      %s96 = sphi 0, %s94
      %s97 = sphi 0, %s96
      %s111 = sphi 0, %s97
      %s115 = sphi 0, %s115
      %s117 = sphi 0, %s115
      %s118 = sphi 0, %s117
      %s132 = sphi 0, %s118
      %s138 = sphi 0, %s140
      %s141 = sphi 0, %s138
      %s142 = sphi 0, %s141
      %s158 = sphi 0, %s142
    $region4: #{tpu_custom_call.1} parent=1 // loop_header_branch
      %21 = sbr.rel (%p19) target = $region8
    $region5: #{tpu_custom_call.1} parent=1 // loop_body
      %s23 = ssub.s32 %s18, 1
      %s24 = ssub.s32 %s18, 2
      %s25 = sadd.s32 %s18, 1
      %s26 = ssub.s32 %s18, %s25
      %p27 = scmp.eq.s32.totalorder %s26, 0
      %s29 = sadd.s32 %s28, 1
      %s30 = scalar_select %p27, %s28, %s29
      %p33 = pneg %p27
      %p34 = scmp.eq.s32.totalorder %s18, 1
      %p35 = por %p33, %p34
      %p36 = scmp.ne.s32.totalorder %s28, %s31
      %p37 = scmp.eq.s32.totalorder %s18, 0
      %p38 = por %p36, %p37
      %p39 = scmp.ne.s32.totalorder %s28, %s31
      %p40 = scmp.eq.s32.totalorder %s23, 1
      %p41 = por %p39, %p40
      %p42 = scmp.ne.s32.totalorder %s31, %s32
      %p43 = scmp.eq.s32.totalorder %s23, 0
      %p44 = por %p42, %p43
      %p45 = scmp.ne.s32.totalorder %s31, %s32
      %p46 = scmp.eq.s32.totalorder %s24, 1
      %p47 = por %p45, %p46
      %p49 = scmp.ne.s32.totalorder %s32, %s48
      %p50 = scmp.eq.s32.totalorder %s24, 0
      %p51 = por %p49, %p50
      %s53 = sadd.s32 %s52, 1
      %p56 = scmp.eq.s32.totalorder %s18, 1
      %p57 = scmp.ne.s32.totalorder %s52, %s54
      %p58 = scmp.eq.s32.totalorder %s18, 0
      %p59 = por %p57, %p58
      %p60 = scmp.ne.s32.totalorder %s52, %s54
      %p61 = scmp.eq.s32.totalorder %s23, 1
      %p62 = por %p60, %p61
      %p63 = scmp.ne.s32.totalorder %s54, %s55
      %p64 = scmp.eq.s32.totalorder %s23, 0
      %p65 = por %p63, %p64
      %p66 = scmp.ne.s32.totalorder %s54, %s55
      %p67 = scmp.eq.s32.totalorder %s24, 1
      %p68 = por %p66, %p67
      %p70 = scmp.ne.s32.totalorder %s55, %s69
      %p71 = scmp.eq.s32.totalorder %s24, 0
      %p72 = por %p70, %p71
      %s74 = sadd.s32 %s73, 1
      %p77 = scmp.eq.s32.totalorder %s18, 1
      %p78 = scmp.ne.s32.totalorder %s73, %s75
      %p79 = scmp.eq.s32.totalorder %s18, 0
      %p80 = por %p78, %p79
      %p81 = scmp.ne.s32.totalorder %s73, %s75
      %p82 = scmp.eq.s32.totalorder %s23, 1
      %p83 = por %p81, %p82
      %p84 = scmp.ne.s32.totalorder %s75, %s76
      %p85 = scmp.eq.s32.totalorder %s23, 0
      %p86 = por %p84, %p85
      %p87 = scmp.ne.s32.totalorder %s75, %s76
      %p88 = scmp.eq.s32.totalorder %s24, 1
      %p89 = por %p87, %p88
      %p91 = scmp.ne.s32.totalorder %s76, %s90
      %p92 = scmp.eq.s32.totalorder %s24, 0
      %p93 = por %p91, %p92
      %s95 = sadd.s32 %s94, 1
      %p98 = scmp.eq.s32.totalorder %s18, 1
      %p99 = scmp.ne.s32.totalorder %s94, %s96
      %p100 = scmp.eq.s32.totalorder %s18, 0
      %p101 = por %p99, %p100
      %p102 = scmp.ne.s32.totalorder %s94, %s96
      %p103 = scmp.eq.s32.totalorder %s23, 1
      %p104 = por %p102, %p103
      %p105 = scmp.ne.s32.totalorder %s96, %s97
      %p106 = scmp.eq.s32.totalorder %s23, 0
      %p107 = por %p105, %p106
      %p108 = scmp.ne.s32.totalorder %s96, %s97
      %p109 = scmp.eq.s32.totalorder %s24, 1
      %p110 = por %p108, %p109
      %p112 = scmp.ne.s32.totalorder %s97, %s111
      %p113 = scmp.eq.s32.totalorder %s24, 0
      %p114 = por %p112, %p113
      %s116 = sadd.s32 %s115, 1
      %p119 = scmp.eq.s32.totalorder %s18, 1
      %p120 = scmp.ne.s32.totalorder %s115, %s117
      %p121 = scmp.eq.s32.totalorder %s18, 0
      %p122 = por %p120, %p121
      %p123 = scmp.ne.s32.totalorder %s115, %s117
      %p124 = scmp.eq.s32.totalorder %s23, 1
      %p125 = por %p123, %p124
      %p126 = scmp.ne.s32.totalorder %s117, %s118
      %p127 = scmp.eq.s32.totalorder %s23, 0
      %p128 = por %p126, %p127
      %p129 = scmp.ne.s32.totalorder %s117, %s118
      %p130 = scmp.eq.s32.totalorder %s24, 1
      %p131 = por %p129, %p130
      %p133 = scmp.ne.s32.totalorder %s118, %s132
      %p134 = scmp.eq.s32.totalorder %s24, 0
      %p135 = por %p133, %p134
      %s136 = ssub.s32 %s18, %s25
      %p137 = scmp.eq.s32.totalorder %s136, 0
      %s139 = sadd.s32 %s138, 1
      %s140 = scalar_select %p137, %s138, %s139
      %p143 = pneg %p137
      %p144 = scmp.eq.s32.totalorder %s18, 1
      %p145 = por %p143, %p144
      %p146 = scmp.ne.s32.totalorder %s138, %s141
      %p147 = scmp.eq.s32.totalorder %s18, 0
      %p148 = por %p146, %p147
      %p149 = scmp.ne.s32.totalorder %s138, %s141
      %p150 = scmp.eq.s32.totalorder %s23, 1
      %p151 = por %p149, %p150
      %p152 = scmp.ne.s32.totalorder %s141, %s142
      %p153 = scmp.eq.s32.totalorder %s23, 0
      %p154 = por %p152, %p153
      %p155 = scmp.ne.s32.totalorder %s141, %s142
      %p156 = scmp.eq.s32.totalorder %s24, 1
      %p157 = por %p155, %p156
      %p159 = scmp.ne.s32.totalorder %s142, %s158
      %p160 = scmp.eq.s32.totalorder %s24, 0
      %p161 = por %p159, %p160
      %p162 = scmp.le.s32.totalorder 1, %s18
      %p163 = scmp.lt.s32.totalorder %s18, 3
      %p164 = pnand %p162, %p163
      %p165 = pneg %p164
      // Predicated region
      $region9: #{tpu_custom_call.1} parent=5 // pred_check
        _
      $region10: #{tpu_custom_call.1} parent=5 // pred_check_branch
        %167 = sbr.rel (%p164) target = $region12
      $region11: #{tpu_custom_call.1} parent=5 // pred_region
        %s168 = ssub.s32 %s18, 1
        // Predicated region
        $region13: #{tpu_custom_call.1} parent=11 // pred_check
          %p169 = pneg %p65
        $region14: #{tpu_custom_call.1} parent=11 // pred_check_branch
          %171 = sbr.rel (%p169) target = $region16
        $region15: #{tpu_custom_call.1} parent=11 // pred_region
          %173 = vsyncadd [#allocation6], 0
          %s174 = sshll.u32 %s1, 4
          %s175 = int_to_ptr.hbm [resolvable:$true] %s174
          %s176 = sshll.u32 [#allocation5], 4
          %s177 = int_to_ptr.vmem [resolvable:$true] %s176
          %182 = dma.hbm_to_vmem [thread:$0]  %s175, 1024, %s177, [#allocation6], 64, 64, 4
        $region16: #{tpu_custom_call.1} parent=11 // pred_fallthru
          _
        // Predicated region
        $region17: #{tpu_custom_call.1} parent=11 // pred_check
          %p183 = pneg %p86
        $region18: #{tpu_custom_call.1} parent=11 // pred_check_branch
          %185 = sbr.rel (%p183) target = $region20
        $region19: #{tpu_custom_call.1} parent=11 // pred_region
          _
        $region20: #{tpu_custom_call.1} parent=11 // pred_fallthru
          _
        // Predicated region
        $region21: #{tpu_custom_call.1} parent=11 // pred_check
          %p186 = pneg %p107
        $region22: #{tpu_custom_call.1} parent=11 // pred_check_branch
          %188 = sbr.rel (%p186) target = $region24
        $region23: #{tpu_custom_call.1} parent=11 // pred_region
          %190 = vsyncadd [#allocation6], 0
          %s191 = sshll.u32 %s3, 4
          %s192 = int_to_ptr.hbm [resolvable:$true] %s191
          %s193 = sshll.u32 [#allocation7], 4
          %s194 = int_to_ptr.vmem [resolvable:$true] %s193
          %199 = dma.hbm_to_vmem [thread:$0]  %s192, 1024, %s194, [#allocation6], 64, 64, 4
        $region24: #{tpu_custom_call.1} parent=11 // pred_fallthru
          _
        // Predicated region
        $region25: #{tpu_custom_call.1} parent=11 // pred_check
          %p200 = pneg %p128
        $region26: #{tpu_custom_call.1} parent=11 // pred_check_branch
          %202 = sbr.rel (%p200) target = $region28
        $region27: #{tpu_custom_call.1} parent=11 // pred_region
          _
        $region28: #{tpu_custom_call.1} parent=11 // pred_fallthru
          _
      $region12: #{tpu_custom_call.1} parent=5 // pred_fallthru
        _
      %p203 = scmp.lt.s32.totalorder %s18, 2
      // Predicated region
      $region29: #{tpu_custom_call.1} parent=5 // pred_check
        %p204 = pneg %p203
      $region30: #{tpu_custom_call.1} parent=5 // pred_check_branch
        %206 = sbr.rel (%p204) target = $region32
      $region31: #{tpu_custom_call.1} parent=5 // pred_region
        // Predicated region
        $region33: #{tpu_custom_call.1} parent=31 // pred_check
          %p207 = pneg %p38
        $region34: #{tpu_custom_call.1} parent=31 // pred_check_branch
          %209 = sbr.rel (%p207) target = $region36
        $region35: #{tpu_custom_call.1} parent=31 // pred_region
          %s210 = sand.u32 %s28, 1
          %s211 = scalar_lea.sflag [#allocation3], %s210
          %s212 = sand.u32 %s28, 1
          %s213 = smul.addr %s212, 8
          %s214 = scalar_lea.vmem [#allocation2], %s213
          %s215 = smul.u32 2, %s18
          %217 = vsyncadd %s211, 0
          %s218 = smul.addr %s215, 4
          %s219 = scalar_lea.hbm %s0, %s218
          %s220 = sshll.u32 %s219, 4
          %s221 = int_to_ptr.hbm [resolvable:$true] %s220
          %s222 = sshll.u32 %s214, 4
          %s223 = int_to_ptr.vmem [resolvable:$true] %s222
          %228 = dma.hbm_to_vmem [thread:$0]  %s221, 128, %s223, %s211, 64, 64, 4
        $region36: #{tpu_custom_call.1} parent=31 // pred_fallthru
          _
      $region32: #{tpu_custom_call.1} parent=5 // pred_fallthru
        _
      %p229 = scmp.le.s32.totalorder 1, %s18
      %p230 = scmp.lt.s32.totalorder %s18, 3
      %p231 = pnand %p229, %p230
      %p232 = pneg %p231
      // Predicated region
      $region37: #{tpu_custom_call.1} parent=5 // pred_check
        _
      $region38: #{tpu_custom_call.1} parent=5 // pred_check_branch
        %234 = sbr.rel (%p231) target = $region40
      $region39: #{tpu_custom_call.1} parent=5 // pred_region
        %s235 = ssub.s32 %s18, 1
        %s236 = sand.u32 %s31, 1
        %s237 = scalar_lea.sflag [#allocation3], %s236
        %s238 = sand.u32 %s31, 1
        %s239 = smul.addr %s238, 8
        %s240 = scalar_lea.vmem [#allocation2], %s239
        // Predicated region
        $region41: #{tpu_custom_call.1} parent=39 // pred_check
          %p241 = pneg %p44
        $region42: #{tpu_custom_call.1} parent=39 // pred_check_branch
          %243 = sbr.rel (%p241) target = $region44
        $region43: #{tpu_custom_call.1} parent=39 // pred_region
          %245 = dma.done %s237, 128
        $region44: #{tpu_custom_call.1} parent=39 // pred_fallthru
          _
        // Predicated region
        $region45: #{tpu_custom_call.1} parent=39 // pred_check
          %p246 = pneg %p65
        $region46: #{tpu_custom_call.1} parent=39 // pred_check_branch
          %248 = sbr.rel (%p246) target = $region48
        $region47: #{tpu_custom_call.1} parent=39 // pred_region
          %250 = dma.done [#allocation6], 1024
        $region48: #{tpu_custom_call.1} parent=39 // pred_fallthru
          _
        // Predicated region
        $region49: #{tpu_custom_call.1} parent=39 // pred_check
          %p251 = pneg %p107
        $region50: #{tpu_custom_call.1} parent=39 // pred_check_branch
          %253 = sbr.rel (%p251) target = $region52
        $region51: #{tpu_custom_call.1} parent=39 // pred_region
          %255 = dma.done [#allocation6], 1024
        $region52: #{tpu_custom_call.1} parent=39 // pred_fallthru
          _
        %s256 = sand.u32 %s31, 1
        %s257 = scalar_lea.sflag [#allocation3], %s256
        %s258 = sand.u32 %s31, 1
        %s259 = smul.addr %s258, 8
        %s260 = scalar_lea.vmem [#allocation2], %s259
        %p261 = pneg %p44
        %p262 = pneg %p41
        %p263 = pneg %p65
        %p264 = pneg %p62
        %p265 = pneg %p86
        %p266 = pneg %p83
        %p267 = pneg %p107
        %p268 = pneg %p104
        %p269 = pneg %p128
        %p270 = pneg %p125
        %p271 = pneg %p154
        %p272 = pneg %p151
        %s273 = sand.u32 %s141, 1
        %s274 = scalar_lea.sflag [#allocation4], %s273
        %s275 = sand.u32 %s141, 1
        %s276 = smul.addr %s275, 16
        %s277 = scalar_lea.vmem [#allocation8], %s276
        %s278 = smul.u32 2, %s23
        %s279 = smul.u32 2, %s23
        %v280 = vld [vmem:[#allocation5] sm:$0xf]
        %v281 = vld [vmem:[#allocation5 + $0x4] sm:$0xf]
        %v282 = vld [vmem:[#allocation5 + $0x8] sm:$0xf]
        %v283 = vld [vmem:[#allocation5 + $0xc] sm:$0xf]
        %v284 = vld [vmem:[#allocation5 + $0x10] sm:$0xf]
        %v285 = vld [vmem:[#allocation5 + $0x14] sm:$0xf]
        %v286 = vld [vmem:[#allocation5 + $0x18] sm:$0xf]
        %v287 = vld [vmem:[#allocation5 + $0x1c] sm:$0xf]
        %v288 = vld [vmem:[#allocation5 + $0x20] sm:$0xf]
        %v289 = vld [vmem:[#allocation5 + $0x24] sm:$0xf]
        %v290 = vld [vmem:[#allocation5 + $0x28] sm:$0xf]
        %v291 = vld [vmem:[#allocation5 + $0x2c] sm:$0xf]
        %v292 = vld [vmem:[#allocation5 + $0x30] sm:$0xf]
        %v293 = vld [vmem:[#allocation5 + $0x34] sm:$0xf]
        %v294 = vld [vmem:[#allocation5 + $0x38] sm:$0xf]
        %v295 = vld [vmem:[#allocation5 + $0x3c] sm:$0xf]
        %v296 = vld [vmem:[%s2] sm:$0x1]
        %v297 = vld [vmem:[#allocation7] sm:$0xf]
        %v298 = vld [vmem:[#allocation7 + $0x4] sm:$0xf]
        %v299 = vld [vmem:[#allocation7 + $0x8] sm:$0xf]
        %v300 = vld [vmem:[#allocation7 + $0xc] sm:$0xf]
        %v301 = vld [vmem:[#allocation7 + $0x10] sm:$0xf]
        %v302 = vld [vmem:[#allocation7 + $0x14] sm:$0xf]
        %v303 = vld [vmem:[#allocation7 + $0x18] sm:$0xf]
        %v304 = vld [vmem:[#allocation7 + $0x1c] sm:$0xf]
        %v305 = vld [vmem:[#allocation7 + $0x20] sm:$0xf]
        %v306 = vld [vmem:[#allocation7 + $0x24] sm:$0xf]
        %v307 = vld [vmem:[#allocation7 + $0x28] sm:$0xf]
        %v308 = vld [vmem:[#allocation7 + $0x2c] sm:$0xf]
        %v309 = vld [vmem:[#allocation7 + $0x30] sm:$0xf]
        %v310 = vld [vmem:[#allocation7 + $0x34] sm:$0xf]
        %v311 = vld [vmem:[#allocation7 + $0x38] sm:$0xf]
        %v312 = vld [vmem:[#allocation7 + $0x3c] sm:$0xf]
        %v313 = vld [vmem:[%s4] sm:$0x1]
        %v314 = vld [vmem:[%s240] sm:$0xf]
        %v315 = vld [vmem:[%s240 + $0x4] sm:$0xf]
        %v317 = vperm.slane %v296, 0
        %v321 = vunpack.c.l.b16 %v314
        %v322 = vunpack.c.l.b16 %v315
        %v323 = vpack.c.b16 %v322, %v321
        %v341 = vunpack.c.l.b16 %v280
        %v342 = vunpack.c.l.b16 %v281
        %v343 = vunpack.c.l.b16 %v282
        %v344 = vunpack.c.l.b16 %v283
        %v345 = vunpack.c.l.b16 %v284
        %v346 = vunpack.c.l.b16 %v285
        %v347 = vunpack.c.l.b16 %v286
        %v348 = vunpack.c.l.b16 %v287
        %v349 = vunpack.c.l.b16 %v288
        %v350 = vunpack.c.l.b16 %v289
        %v351 = vunpack.c.l.b16 %v290
        %v352 = vunpack.c.l.b16 %v291
        %v353 = vunpack.c.l.b16 %v292
        %v354 = vunpack.c.l.b16 %v293
        %v355 = vunpack.c.l.b16 %v294
        %v356 = vunpack.c.l.b16 %v295
        %v357 = vpack.c.b16 %v342, %v341
        %v358 = vpack.c.b16 %v344, %v343
        %v359 = vpack.c.b16 %v346, %v345
        %v360 = vpack.c.b16 %v348, %v347
        %v361 = vpack.c.b16 %v350, %v349
        %v362 = vpack.c.b16 %v352, %v351
        %v363 = vpack.c.b16 %v354, %v353
        %v364 = vpack.c.b16 %v356, %v355
        %373 = vmatpush.bf16.msra.mxu0 %v364
        %374 = vmatpush.bf16.msra.mxu0 %v363
        %375 = vmatpush.bf16.msra.mxu0 %v362
        %376 = vmatpush.bf16.msra.mxu0 %v361
        %377 = vmatpush.bf16.msra.mxu0 %v360
        %378 = vmatpush.bf16.msra.mxu0 %v359
        %379 = vmatpush.bf16.msra.mxu0 %v358
        %380 = vmatpush.bf16.msra.mxu0 %v357
        %381 = vmatmul.bf16.gmra.mxu0 %v323
        %v382 = vpop.f32.mrf.mxu0
        %v383 = vadd.f32 %v317, %v382
        %v384 = vpop.f32.mrf.mxu0
        %v385 = vadd.f32 %v317, %v384
        %386 = vdwg.mxu0
        %v387 = vmax.f32 %v383, 0.0
        %v388 = vmax.f32 %v385, 0.0
        %v389 = vpack.c.bf16 %v388, %v387
        %v391 = vperm.slane %v313, 0
        %v409 = vunpack.c.l.b16 %v297
        %v410 = vunpack.c.l.b16 %v298
        %v411 = vunpack.c.l.b16 %v299
        %v412 = vunpack.c.l.b16 %v300
        %v413 = vunpack.c.l.b16 %v301
        %v414 = vunpack.c.l.b16 %v302
        %v415 = vunpack.c.l.b16 %v303
        %v416 = vunpack.c.l.b16 %v304
        %v417 = vunpack.c.l.b16 %v305
        %v418 = vunpack.c.l.b16 %v306
        %v419 = vunpack.c.l.b16 %v307
        %v420 = vunpack.c.l.b16 %v308
        %v421 = vunpack.c.l.b16 %v309
        %v422 = vunpack.c.l.b16 %v310
        %v423 = vunpack.c.l.b16 %v311
        %v424 = vunpack.c.l.b16 %v312
        %v425 = vpack.c.b16 %v410, %v409
        %v426 = vpack.c.b16 %v412, %v411
        %v427 = vpack.c.b16 %v414, %v413
        %v428 = vpack.c.b16 %v416, %v415
        %v429 = vpack.c.b16 %v418, %v417
        %v430 = vpack.c.b16 %v420, %v419
        %v431 = vpack.c.b16 %v422, %v421
        %v432 = vpack.c.b16 %v424, %v423
        %441 = vmatpush.bf16.msra.mxu0 %v432
        %442 = vmatpush.bf16.msra.mxu0 %v431
        %443 = vmatpush.bf16.msra.mxu0 %v430
        %444 = vmatpush.bf16.msra.mxu0 %v429
        %445 = vmatpush.bf16.msra.mxu0 %v428
        %446 = vmatpush.bf16.msra.mxu0 %v427
        %447 = vmatpush.bf16.msra.mxu0 %v426
        %448 = vmatpush.bf16.msra.mxu0 %v425
        %449 = vmatmul.bf16.gmra.mxu0 %v389
        %v450 = vpop.f32.mrf.mxu0
        %v451 = vadd.f32 %v391, %v450
        %v452 = vpop.f32.mrf.mxu0
        %v453 = vadd.f32 %v391, %v452
        %454 = vdwg.mxu0
        %455 = vmax.xlane.f32.xlu0 %v451
        %v456 = vpop.xlane.xlu0 %455
        %457 = vmax.xlane.f32.xlu0 %v453
        %v458 = vpop.xlane.xlu0 %457
        %v459 = vsub.f32 %v451, %v456
        %v460 = vsub.f32 %v453, %v458
        %v461 = vmul.f32 %v459, 1.442695
        %v462 = vpow.pop %v461
        %v463 = vmul.f32 %v460, 1.442695
        %v464 = vpow.pop %v463
        %465 = vadd.xlane.f32.xlu0 %v462
        %v466 = vpop.xlane.xlu0 %465
        %467 = vadd.xlane.f32.xlu0 %v464
        %v468 = vpop.xlane.xlu0 %467
        %v469 = vlog2.pop %v466
        %v470 = vmul.f32 %v469, 0.6931472
        %v471 = vlog2.pop %v468
        %v472 = vmul.f32 %v471, 0.6931472
        %v473 = vsub.f32 %v459, %v470
        %v474 = vsub.f32 %v460, %v472
        %475 = vst [vmem:[%s277] sm:$0xff] %v473
        %476 = vst [vmem:[%s277 + $0x8] sm:$0xff] %v474
        %s477 = sand.u32 %s141, 1
        %s478 = scalar_lea.sflag [#allocation4], %s477
        %s479 = sand.u32 %s141, 1
        %s480 = smul.addr %s479, 16
        %s481 = scalar_lea.vmem [#allocation8], %s480
        // Predicated region
        $region53: #{tpu_custom_call.1} parent=39 // pred_check
          %p482 = pneg %p151
        $region54: #{tpu_custom_call.1} parent=39 // pred_check_branch
          %484 = sbr.rel (%p482) target = $region56
        $region55: #{tpu_custom_call.1} parent=39 // pred_region
          %s485 = smul.u32 2, %s23
          %487 = vsyncadd %s478, 0
          %s488 = smul.addr %s485, 8
          %s489 = scalar_lea.hbm %s5, %s488
          %s490 = sshll.u32 %s481, 4
          %s491 = int_to_ptr.vmem [resolvable:$true] %s490
          %s492 = sshll.u32 %s489, 4
          %s493 = int_to_ptr.hbm [resolvable:$true] %s492
          %498 = dma.vmem_to_hbm [thread:$0]  %s491, 256, %s493, %s478, 128, 128, 8
        $region56: #{tpu_custom_call.1} parent=39 // pred_fallthru
          _
      $region40: #{tpu_custom_call.1} parent=5 // pred_fallthru
        _
      %p499 = scmp.le.s32.totalorder 2, %s18
      // Predicated region
      $region57: #{tpu_custom_call.1} parent=5 // pred_check
        %p500 = pneg %p499
      $region58: #{tpu_custom_call.1} parent=5 // pred_check_branch
        %502 = sbr.rel (%p500) target = $region60
      $region59: #{tpu_custom_call.1} parent=5 // pred_region
        %s503 = ssub.s32 %s18, 2
        // Predicated region
        $region61: #{tpu_custom_call.1} parent=59 // pred_check
          %p504 = pneg %p157
        $region62: #{tpu_custom_call.1} parent=59 // pred_check_branch
          %506 = sbr.rel (%p504) target = $region64
        $region63: #{tpu_custom_call.1} parent=59 // pred_region
          %s507 = sand.u32 %s142, 1
          %s508 = scalar_lea.sflag [#allocation4], %s507
          %s509 = sand.u32 %s142, 1
          %s510 = smul.addr %s509, 16
          %s511 = scalar_lea.vmem [#allocation8], %s510
          %513 = dma.done %s508, 256
        $region64: #{tpu_custom_call.1} parent=59 // pred_fallthru
          _
      $region60: #{tpu_custom_call.1} parent=5 // pred_fallthru
        _
    $region6: #{tpu_custom_call.1} parent=1 // loop_footer
      %s22 = sadd.s32 1, %s18
    $region7: #{tpu_custom_call.1} parent=1 // loop_footer_branch
      %17 = sbr.rel target = $region3
    $region8: #{tpu_custom_call.1} parent=1 // loop_exit
      _
    %514 = vsyncpa [#allocation3], 1
    %s515 = scalar_lea.sflag [#allocation3], 1
    %516 = vsyncpa %s515, 1
    %517 = vsyncpa [#allocation6], 1
    %518 = vsyncpa [#allocation4], 1
    %s519 = scalar_lea.sflag [#allocation4], 1
    %520 = vsyncpa %s519, 1

</llo_original>
